<compile_context>
chip_gen: v6e
topology: v6e:2x2x1
jax: 0.10.0
libtpu: 0.0.40
codegen_flags: <defaults>
</compile_context>

<pallas_src>
import jax
import jax.numpy as jnp
from jax.experimental import pallas as pl
from jax.experimental.pallas import tpu as pltpu


def _round_up(x, m):
    return (x + m - 1) // m * m


# dot_general dims for A @ B^T (contract the last dim of both operands) —
# same pattern as the TPU flash-attention kernels.
_TRANS_B_DIMS = (((1,), (1,)), ((), ()))


def _edge_scatter_kernel(eb_ref, xt_ref, w1t_ref, b1_ref, part_ref, acc_ref):
    """Streams lane-dense edge tiles; accumulates per-graph pre_pool sums.

    Per grid step (c = chunk on the parallel axis, s = step on the edge axis):
      eb_ref  : (1, tE)          int32  graph id per edge (sentinel >= g_pad pads)
      xt_ref  : (in_pad, tE)     bf16   transposed edge features (lanes = edges)
      w1t_ref : (hidden, in_pad) bf16   resident pre_pool weight (transposed)
      b1_ref  : (hidden, 1)      f32    resident pre_pool bias (column)
      part_ref: (hidden, g_pad)  f32    per-chunk partial sums (output block)
      acc_ref : (hidden, g_pad)  f32    running accumulator (VMEM scratch)
    """
    s = pl.program_id(1)

    @pl.when(s == 0)
    def _init():
        acc_ref[...] = jnp.zeros_like(acc_ref)

    # pre_pool: hT = ReLU(W1^T @ xT + b1) -> (hidden, tE). bf16 MXU, f32 accum,
    # f32 elementwise.
    h = jnp.dot(w1t_ref[...], xt_ref[...], preferred_element_type=jnp.float32)
    h = jnp.maximum(h + b1_ref[...], 0.0)
    h_bf = h.astype(jnp.bfloat16)                       # rounded once; sums stay f32

    # One-hot scatter-sum: acc[:, g] += sum_{e in g} hT[:, e].
    # onehot is built lane-dense (g_pad, tE); sentinel ids match no row.
    g_pad = acc_ref.shape[1]
    gid = jax.lax.broadcasted_iota(jnp.int32, (g_pad, 1), 0)
    onehot = (gid == eb_ref[...]).astype(jnp.bfloat16)  # (g_pad, tE), 0/1 exact
    acc_ref[...] += jax.lax.dot_general(
        h_bf, onehot, _TRANS_B_DIMS, preferred_element_type=jnp.float32)

    @pl.when(s == pl.num_programs(1) - 1)
    def _flush():
        part_ref[...] = acc_ref[...]


def _pool_mlp_kernel(part_ref, cnt_ref, w2t_ref, b2_ref, w3t_ref, b3_ref, o_ref):
    """Combine per-chunk partials, exact mean-pool, post_pool MLP (runs once).

    Everything stays transposed (graphs on the lane axis), all f32:
      part_ref: (n_chunks, hidden, g_pad)   cnt_ref: (1, g_pad)
      w2t_ref : (hidden, hidden)            b2_ref : (hidden, 1)
      w3t_ref : (out_dim, hidden)           b3_ref : (out_dim, 1)
      o_ref   : (out_dim, g_pad)
    """
    sum_t = jnp.sum(part_ref[...], axis=0)                        # (hidden, g_pad)
    # Exact f32 divide (no approx reciprocal); empty graphs -> 0 (count clamped).
    pooled_t = sum_t / jnp.maximum(cnt_ref[...], 1.0)
    h2 = jnp.dot(w2t_ref[...], pooled_t, preferred_element_type=jnp.float32)
    h2 = jnp.maximum(h2 + b2_ref[...], 0.0)                       # (hidden, g_pad)
    out = jnp.dot(w3t_ref[...], h2, preferred_element_type=jnp.float32)
    o_ref[...] = out + b3_ref[...]                                # (out_dim, g_pad)


def ds_edge_readout(edge_index, edge_attr, batch, params, num_graphs, *,
                    tile_e=4096, num_chunks=2, edge_dtype=jnp.bfloat16):
    """JAX wrapper.  Integer glue (edge->graph gather, per-graph edge counts,
    padding/transposes) stays in plain JAX; all matmuls / ReLU / scatter-mean /
    MLP run inside two Pallas calls."""
    w1, b1, w2, b2, w3, b3 = params
    E, in_dim = edge_attr.shape
    hidden = w1.shape[1]
    out_dim = w3.shape[1]

    # Glue: graph id per edge and per-graph edge counts (counts are exact in
    # f32 up to 2^24 edges per graph).
    edge_batch = batch[edge_index[0]].astype(jnp.int32)                 # (E,)
    g_pad = _round_up(max(num_graphs, 1), 8)
    counts = jax.ops.segment_sum(jnp.ones((E,), jnp.float32), edge_batch,
                                 num_segments=g_pad).reshape(1, g_pad)

    # Edge tiling: lanes = edges (multiple of 128).  The edge range is split
    # into `num_chunks` independent partial reductions; the leading "parallel"
    # grid axis maps one chunk per TensorCore on v7x and is a cheap sequential
    # loop on v5e/v6e.
    t_e = _round_up(min(tile_e, _round_up(E, 128)), 128)
    n_tiles = pl.cdiv(E, t_e)
    n_chunks = max(1, min(num_chunks, n_tiles))
    steps = pl.cdiv(n_tiles, n_chunks)
    e_pad = n_chunks * steps * t_e

    in_pad = _round_up(in_dim, 16)   # bf16 sublane packing

    # Padded / transposed operands.  Sentinel graph id == g_pad matches no
    # one-hot row, so padded edges contribute nothing to sums (counts exclude
    # them by construction).
    eb2d = jnp.full((1, e_pad), g_pad, jnp.int32).at[0, :E].set(edge_batch)
    xt = jnp.zeros((in_pad, e_pad), edge_dtype).at[:in_dim, :E].set(
        edge_attr.astype(edge_dtype).T)
    w1t = jnp.zeros((hidden, in_pad), jnp.bfloat16).at[:, :in_dim].set(
        w1.astype(jnp.bfloat16).T)
    b1c = b1.reshape(hidden, 1).astype(jnp.float32)

    edge_map = lambda c, s: (0, c * steps + s)
    const = lambda shape: pl.BlockSpec(shape, lambda c, s: (0, 0))

    partials = pl.pallas_call(
        _edge_scatter_kernel,
        out_shape=jax.ShapeDtypeStruct((n_chunks, hidden, g_pad), jnp.float32),
        grid=(n_chunks, steps),
        in_specs=[
            pl.BlockSpec((1, t_e), edge_map),           # edge graph ids
            pl.BlockSpec((in_pad, t_e), edge_map),      # transposed edge features
            const((hidden, in_pad)),                    # w1^T (resident, bf16)
            const((hidden, 1)),                         # b1 column (f32)
        ],
        out_specs=pl.BlockSpec((None, hidden, g_pad), lambda c, s: (c, 0, 0)),
        scratch_shapes=[pltpu.VMEM((hidden, g_pad), jnp.float32)],
        compiler_params=pltpu.CompilerParams(
            dimension_semantics=("parallel", "arbitrary")),
    )(eb2d, xt, w1t, b1c)

    # Combine partials + mean + post_pool MLP: tiny, single invocation, f32.
    out_t = pl.pallas_call(
        _pool_mlp_kernel,
        out_shape=jax.ShapeDtypeStruct((out_dim, g_pad), jnp.float32),
    )(partials, counts,
      w2.T.astype(jnp.float32), b2.reshape(hidden, 1).astype(jnp.float32),
      w3.T.astype(jnp.float32), b3.reshape(out_dim, 1).astype(jnp.float32))

    return out_t[:, :num_graphs].T                      # (num_graphs, out_dim)


def _reference(edge_index, edge_attr, batch, params, num_graphs):
    """Pure-JAX (f32) reference mirroring the PyTorch module."""
    w1, b1, w2, b2, w3, b3 = params
    h = jnp.maximum(edge_attr @ w1 + b1, 0.0)
    edge_batch = batch[edge_index[0]]
    summed = jax.ops.segment_sum(h, edge_batch, num_segments=num_graphs)
    counts = jax.ops.segment_sum(jnp.ones((h.shape[0],), jnp.float32),
                                 edge_batch, num_segments=num_graphs)
    pooled = summed / jnp.maximum(counts, 1.0)[:, None]
    h2 = jnp.maximum(pooled @ w2 + b2, 0.0)
    return h2 @ w3 + b3


if __name__ == "__main__":
    key = jax.random.PRNGKey(0)

    # Small shapes: N nodes, E edges, num_layers=2 config of DSEdgeReadout.
    N, E = 64, 600
    in_dim, hidden_dim, out_dim = 16, 32, 8
    num_graphs = 3

    k = jax.random.split(key, 10)
    w1 = jax.random.normal(k[0], (in_dim, hidden_dim), jnp.float32) * 0.1
    b1 = jax.random.normal(k[1], (1, hidden_dim), jnp.float32) * 0.1
    w2 = jax.random.normal(k[2], (hidden_dim, hidden_dim), jnp.float32) * 0.1
    b2 = jax.random.normal(k[3], (1, hidden_dim), jnp.float32) * 0.1
    w3 = jax.random.normal(k[4], (hidden_dim, out_dim), jnp.float32) * 0.1
    b3 = jax.random.normal(k[5], (1, out_dim), jnp.float32) * 0.1
    params = (w1, b1, w2, b2, w3, b3)

    batch = jnp.sort(jax.random.randint(k[6], (N,), 0, num_graphs)).astype(jnp.int32)
    src = jax.random.randint(k[7], (E,), 0, N).astype(jnp.int32)
    dst = jax.random.randint(k[8], (E,), 0, N).astype(jnp.int32)
    edge_index = jnp.stack([src, dst], axis=0)                   # (2, E)
    edge_attr = jax.random.normal(k[9], (E, in_dim), jnp.float32)

    # tile_e=256 -> 2 chunks x 2 steps over the padded edge stream: exercises
    # the parallel chunk split, multi-step accumulation, and edge padding.
    out = ds_edge_readout(edge_index, edge_attr, batch, params, num_graphs,
                          tile_e=256)
    out = jax.block_until_ready(out)

    ref = _reference(edge_index, edge_attr, batch, params, num_graphs)
    assert out.shape == (num_graphs, out_dim)
    # bf16 edge stream / bf16 w1 / bf16 scatter operands (f32 accumulation,
    # exact mean divide) -> mixed-precision tolerance vs the f32 reference.
    assert jnp.allclose(out, ref, atol=1e-2, rtol=1e-2), "mismatch vs reference"

    print("KERNEL_OK")
</pallas_src>

<mosaic_0001>
module attributes {stable_mosaic.version = 11 : i64} {
  func.func @_edge_scatter_kernel(%arg0: i32, %arg1: i32, %arg2: memref<1x256xi32, #tpu.memory_space<vmem>>, %arg3: memref<16x256xbf16, #tpu.memory_space<vmem>>, %arg4: memref<32x16xbf16, #tpu.memory_space<vmem>>, %arg5: memref<32x1xf32, #tpu.memory_space<vmem>>, %arg6: memref<1x32x8xf32, #tpu.memory_space<vmem>>, %arg7: memref<32x8xf32, #tpu.memory_space<vmem>>) attributes {dimension_semantics = [#tpu.dimension_semantics<parallel>, #tpu.dimension_semantics<arbitrary>], iteration_bounds = array<i64: 2, 2>, scalar_prefetch = 0 : i64, scratch_operands = 1 : i64, tpu.core_type = #tpu.core_type<tc>, window_params = [{transform_indices = @transform_0, window_bounds = array<i64: 1, 256>}, {transform_indices = @transform_1, window_bounds = array<i64: 16, 256>}, {pipeline_mode = #tpu.pipeline_mode<synchronous>, transform_indices = @transform_2, window_bounds = array<i64: 32, 16>}, {pipeline_mode = #tpu.pipeline_mode<synchronous>, transform_indices = @transform_3, window_bounds = array<i64: 32, 1>}, {transform_indices = @transform_4, window_bounds = array<i64: 1, 32, 8>}]} {
    %c0_i32 = arith.constant 0 : i32
    %0 = arith.cmpi eq, %arg1, %c0_i32 : i32
    %1 = arith.extui %0 : i1 to i32
    %c0_i32_0 = arith.constant 0 : i32
    %2 = arith.cmpi ne, %1, %c0_i32_0 : i32
    scf.if %2 {
      %cst_15 = arith.constant 0.000000e+00 : f32
      %27 = vector.broadcast %cst_15 : f32 to vector<32x8xf32>
      %c0_16 = arith.constant 0 : index
      %c0_17 = arith.constant 0 : index
      %28 = vector.load %arg7[%c0_16, %c0_17] : memref<32x8xf32, #tpu.memory_space<vmem>>, vector<32x8xf32>
      tpu.vector_store %arg7[%c0_16, %c0_17], %27 {strides = array<i32>} : memref<32x8xf32, #tpu.memory_space<vmem>>, vector<32x8xf32>,
    } else {
    }
    %c0 = arith.constant 0 : index
    %c0_1 = arith.constant 0 : index
    %3 = vector.load %arg4[%c0, %c0_1] : memref<32x16xbf16, #tpu.memory_space<vmem>>, vector<32x16xbf16>
    %c0_2 = arith.constant 0 : index
    %c0_3 = arith.constant 0 : index
    %4 = vector.load %arg3[%c0_2, %c0_3] : memref<16x256xbf16, #tpu.memory_space<vmem>>, vector<16x256xbf16>
    %cst = arith.constant dense<0.000000e+00> : vector<32x256xf32>
    %5 = tpu.matmul %3, %4, %cst {dimension_numbers = #tpu.dot_dimension_numbers<[1], [0], [0], [1], [0, 0, 1, 1], [], []>} : vector<32x16xbf16>, vector<16x256xbf16>, vector<32x256xf32> -> vector<32x256xf32>
    %c0_4 = arith.constant 0 : index
    %c0_5 = arith.constant 0 : index
    %6 = vector.load %arg5[%c0_4, %c0_5] : memref<32x1xf32, #tpu.memory_space<vmem>>, vector<32x1xf32>
    %7 = vector.broadcast %6 : vector<32x1xf32> to vector<32x256xf32>
    %8 = arith.addf %5, %7 : vector<32x256xf32>
    %cst_6 = arith.constant 0.000000e+00 : f32
    %9 = vector.broadcast %cst_6 : f32 to vector<32x256xf32>
    %10 = arith.maximumf %8, %9 : vector<32x256xf32>
    %11 = arith.truncf %10 : vector<32x256xf32> to vector<32x256xbf16>
    %12 = tpu.iota {dimensions = array<i32: 0>} : vector<8x1xi32>
    %c0_7 = arith.constant 0 : index
    %c0_8 = arith.constant 0 : index
    %13 = vector.load %arg2[%c0_7, %c0_8] : memref<1x256xi32, #tpu.memory_space<vmem>>, vector<1x256xi32>
    %14 = vector.broadcast %12 : vector<8x1xi32> to vector<8x256xi32>
    %15 = vector.broadcast %13 : vector<1x256xi32> to vector<8x256xi32>
    %16 = arith.cmpi eq, %14, %15 : vector<8x256xi32>
    %17 = arith.extui %16 : vector<8x256xi1> to vector<8x256xi32>
    %18 = arith.sitofp %17 : vector<8x256xi32> to vector<8x256xf32>
    %19 = arith.truncf %18 : vector<8x256xf32> to vector<8x256xbf16>
    %c0_9 = arith.constant 0 : index
    %c0_10 = arith.constant 0 : index
    %20 = vector.load %arg7[%c0_9, %c0_10] : memref<32x8xf32, #tpu.memory_space<vmem>>, vector<32x8xf32>
    %cst_11 = arith.constant dense<0.000000e+00> : vector<32x8xf32>
    %21 = tpu.matmul %11, %19, %cst_11 {dimension_numbers = #tpu.dot_dimension_numbers<[1], [1], [0], [0], [0, 0, 1, 0], [], []>} : vector<32x256xbf16>, vector<8x256xbf16>, vector<32x8xf32> -> vector<32x8xf32>
    %22 = arith.addf %20, %21 : vector<32x8xf32>
    %c0_12 = arith.constant 0 : index
    %c0_13 = arith.constant 0 : index
    %23 = vector.load %arg7[%c0_12, %c0_13] : memref<32x8xf32, #tpu.memory_space<vmem>>, vector<32x8xf32>
    tpu.vector_store %arg7[%c0_12, %c0_13], %22 {strides = array<i32>} : memref<32x8xf32, #tpu.memory_space<vmem>>, vector<32x8xf32>,
    %c1_i32 = arith.constant 1 : i32
    %24 = arith.cmpi eq, %arg1, %c1_i32 : i32
    %25 = arith.extui %24 : i1 to i32
    %c0_i32_14 = arith.constant 0 : i32
    %26 = arith.cmpi ne, %25, %c0_i32_14 : i32
    scf.if %26 {
      %c0_15 = arith.constant 0 : index
      %c0_16 = arith.constant 0 : index
      %27 = vector.load %arg7[%c0_15, %c0_16] : memref<32x8xf32, #tpu.memory_space<vmem>>, vector<32x8xf32>
      %c0_17 = arith.constant 0 : index
      %c0_18 = arith.constant 0 : index
      %c0_19 = arith.constant 0 : index
      %28 = vector.load %arg6[%c0_17, %c0_18, %c0_19] : memref<1x32x8xf32, #tpu.memory_space<vmem>>, vector<1x32x8xf32>
      %29 = vector.shape_cast %28 : vector<1x32x8xf32> to vector<32x8xf32>
      %30 = vector.shape_cast %27 : vector<32x8xf32> to vector<1x32x8xf32>
      tpu.vector_store %arg6[%c0_17, %c0_18, %c0_19], %30 {strides = array<i32>} : memref<1x32x8xf32, #tpu.memory_space<vmem>>, vector<1x32x8xf32>,
    } else {
    }
    return
  }
  func.func @transform_0(%arg0: i32, %arg1: i32) -> (i32, i32) {
    %c2_i32 = arith.constant 2 : i32
    %0 = arith.muli %arg0, %c2_i32 : i32
    %1 = arith.addi %0, %arg1 : i32
    %c0_i32 = arith.constant 0 : i32
    %c0_i32_0 = arith.constant 0 : i32
    return %c0_i32, %1 : i32, i32
  }
  func.func @transform_1(%arg0: i32, %arg1: i32) -> (i32, i32) {
    %c2_i32 = arith.constant 2 : i32
    %0 = arith.muli %arg0, %c2_i32 : i32
    %1 = arith.addi %0, %arg1 : i32
    %c0_i32 = arith.constant 0 : i32
    %c0_i32_0 = arith.constant 0 : i32
    return %c0_i32, %1 : i32, i32
  }
  func.func @transform_2(%arg0: i32, %arg1: i32) -> (i32, i32) {
    %c0_i32 = arith.constant 0 : i32
    %c0_i32_0 = arith.constant 0 : i32
    %c0_i32_1 = arith.constant 0 : i32
    return %c0_i32, %c0_i32_0 : i32, i32
  }
  func.func @transform_3(%arg0: i32, %arg1: i32) -> (i32, i32) {
    %c0_i32 = arith.constant 0 : i32
    %c0_i32_0 = arith.constant 0 : i32
    %c0_i32_1 = arith.constant 0 : i32
    return %c0_i32, %c0_i32_0 : i32, i32
  }
  func.func @transform_4(%arg0: i32, %arg1: i32) -> (i32, i32, i32) {
    %c0_i32 = arith.constant 0 : i32
    %c0_i32_0 = arith.constant 0 : i32
    %c0_i32_1 = arith.constant 0 : i32
    return %arg0, %c0_i32, %c0_i32_0 : i32, i32, i32
  }
}

</mosaic_0001>

<llo_original>
// kernel: tpu_custom_call.1
$region0: #{tpu_custom_call.1}
  #allocation0 [shape = 'u32[]', space=smem, size = 0x4, offset = 0x4, fixed_abs, tag = 'smem constant byte address 0x4 - core index']
  #allocation1 [shape = 'u32[144,128]{1,0:T(1,128)}', space=vmem, size = 0x12000, scoped, tag = 'internal scratch']
  #allocation2 [shape = 'f32[32,8]{1,0:T(8,128)}', space=vmem, size = 0x4000, scoped, tag = 'scratch operand']
  %s0 = inlined_call_operand.vmem [shape: s32[1,1024], index: 0, kind: input, shape index: {}]
  %s1 = inlined_call_operand.hbm [shape: bf16[16,1024], index: 1, kind: input, shape index: {}]
  %s2 = inlined_call_operand.vmem [shape: bf16[32,16], index: 2, kind: input, shape index: {}]
  %s3 = inlined_call_operand.vmem [shape: f32[32,1], index: 3, kind: input, shape index: {}]
  %s4 = inlined_call_operand.vmem [shape: f32[2,32,8], index: 4, kind: output, shape index: {}]
  %s5 = sld [smem:[#allocation0]]
  $region61: #{tpu_custom_call.1} parent=0
    _
  %s7 = ssub.s32 1, %s5
  %s8 = scalar_select 0, %s7, %s5
  $region1: #{tpu_custom_call.1} parent=0
    #allocation3 [shape = 'u8[16384]{0}', space=vmem, size = 0x4000, scoped, tag = 'input window, operand 1']
    #allocation4 [shape = 's32[2]{0}', space=sflag, size = 0x8, scoped, tag = 'scoped memory for tpu_custom_call.1']
    %9 = vsyncpa [#allocation4], 0
    %s10 = scalar_lea.sflag [#allocation4], 1
    %11 = vsyncpa %s10, 0
    loop: start=0, step=1, limit=6
    $region2: #{tpu_custom_call.1} parent=1 // loop_pre_header
      _
    $region3: #{tpu_custom_call.1} parent=1 // loop_header
      %s13 = sphi 0, %s17
      %p14 = scmp.ge.s32.totalorder %s13, 6
      %s20 = sphi 0, %s32
      %s21 = sphi 0, %s28
      %s22 = sphi 0, %s20
      %s23 = sphi 0, %s21
      %s24 = sphi 0, %s22
      %s25 = sphi 0, %s23
      %s39 = sphi 0, %s41
      %s42 = sphi 0, %s39
      %s43 = sphi 0, %s42
      %s59 = sphi 0, %s43
      %s69 = sphi 0, %s71
      %s72 = sphi 0, %s69
      %s73 = sphi 0, %s72
      %s89 = sphi 0, %s73
      %s93 = sphi 0, %s93
      %s95 = sphi 0, %s93
      %s96 = sphi 0, %s95
      %s110 = sphi 0, %s96
      %s114 = sphi 0, %s114
      %s116 = sphi 0, %s114
      %s117 = sphi 0, %s116
      %s131 = sphi 0, %s117
      %s137 = sphi 0, %s139
      %s140 = sphi 0, %s137
      %s141 = sphi 0, %s140
      %s157 = sphi 0, %s141
    $region4: #{tpu_custom_call.1} parent=1 // loop_header_branch
      %16 = sbr.rel (%p14) target = $region8
    $region5: #{tpu_custom_call.1} parent=1 // loop_body
      %s18 = ssub.s32 %s13, 1
      %s19 = ssub.s32 %s13, 2
      %s26 = sadd.s32 1, %s21
      %p27 = scmp.ge.s32.totalorder %s26, 2
      %s28 = scalar_select %p27, 0, %s26
      %s29 = sadd.s32 1, %s20
      %s30 = scalar_select %p27, %s29, %s20
      %p31 = scmp.ge.s32.totalorder %s30, 2
      %s32 = scalar_select %p31, 0, %s30
      %s33 = smul.u32 %s20, 2
      %s34 = sadd.s32 %s33, %s21
      %s35 = smul.u32 %s32, 2
      %s36 = sadd.s32 %s35, %s28
      %s37 = ssub.s32 %s34, %s36
      %p38 = scmp.eq.s32.totalorder %s37, 0
      %s40 = sadd.s32 %s39, 1
      %s41 = scalar_select %p38, %s39, %s40
      %p44 = pneg %p38
      %p45 = scmp.eq.s32.totalorder %s13, 3
      %p46 = por %p44, %p45
      %p47 = scmp.ne.s32.totalorder %s39, %s42
      %p48 = scmp.eq.s32.totalorder %s13, 0
      %p49 = por %p47, %p48
      %p50 = scmp.ne.s32.totalorder %s39, %s42
      %p51 = scmp.eq.s32.totalorder %s18, 3
      %p52 = por %p50, %p51
      %p53 = scmp.ne.s32.totalorder %s42, %s43
      %p54 = scmp.eq.s32.totalorder %s18, 0
      %p55 = por %p53, %p54
      %p56 = scmp.ne.s32.totalorder %s42, %s43
      %p57 = scmp.eq.s32.totalorder %s19, 3
      %p58 = por %p56, %p57
      %p60 = scmp.ne.s32.totalorder %s43, %s59
      %p61 = scmp.eq.s32.totalorder %s19, 0
      %p62 = por %p60, %p61
      %s63 = smul.u32 %s20, 2
      %s64 = sadd.s32 %s63, %s21
      %s65 = smul.u32 %s32, 2
      %s66 = sadd.s32 %s65, %s28
      %s67 = ssub.s32 %s64, %s66
      %p68 = scmp.eq.s32.totalorder %s67, 0
      %s70 = sadd.s32 %s69, 1
      %s71 = scalar_select %p68, %s69, %s70
      %p74 = pneg %p68
      %p75 = scmp.eq.s32.totalorder %s13, 3
      %p76 = por %p74, %p75
      %p77 = scmp.ne.s32.totalorder %s69, %s72
      %p78 = scmp.eq.s32.totalorder %s13, 0
      %p79 = por %p77, %p78
      %p80 = scmp.ne.s32.totalorder %s69, %s72
      %p81 = scmp.eq.s32.totalorder %s18, 3
      %p82 = por %p80, %p81
      %p83 = scmp.ne.s32.totalorder %s72, %s73
      %p84 = scmp.eq.s32.totalorder %s18, 0
      %p85 = por %p83, %p84
      %p86 = scmp.ne.s32.totalorder %s72, %s73
      %p87 = scmp.eq.s32.totalorder %s19, 3
      %p88 = por %p86, %p87
      %p90 = scmp.ne.s32.totalorder %s73, %s89
      %p91 = scmp.eq.s32.totalorder %s19, 0
      %p92 = por %p90, %p91
      %s94 = sadd.s32 %s93, 1
      %p97 = scmp.eq.s32.totalorder %s13, 3
      %p98 = scmp.ne.s32.totalorder %s93, %s95
      %p99 = scmp.eq.s32.totalorder %s13, 0
      %p100 = por %p98, %p99
      %p101 = scmp.ne.s32.totalorder %s93, %s95
      %p102 = scmp.eq.s32.totalorder %s18, 3
      %p103 = por %p101, %p102
      %p104 = scmp.ne.s32.totalorder %s95, %s96
      %p105 = scmp.eq.s32.totalorder %s18, 0
      %p106 = por %p104, %p105
      %p107 = scmp.ne.s32.totalorder %s95, %s96
      %p108 = scmp.eq.s32.totalorder %s19, 3
      %p109 = por %p107, %p108
      %p111 = scmp.ne.s32.totalorder %s96, %s110
      %p112 = scmp.eq.s32.totalorder %s19, 0
      %p113 = por %p111, %p112
      %s115 = sadd.s32 %s114, 1
      %p118 = scmp.eq.s32.totalorder %s13, 3
      %p119 = scmp.ne.s32.totalorder %s114, %s116
      %p120 = scmp.eq.s32.totalorder %s13, 0
      %p121 = por %p119, %p120
      %p122 = scmp.ne.s32.totalorder %s114, %s116
      %p123 = scmp.eq.s32.totalorder %s18, 3
      %p124 = por %p122, %p123
      %p125 = scmp.ne.s32.totalorder %s116, %s117
      %p126 = scmp.eq.s32.totalorder %s18, 0
      %p127 = por %p125, %p126
      %p128 = scmp.ne.s32.totalorder %s116, %s117
      %p129 = scmp.eq.s32.totalorder %s19, 3
      %p130 = por %p128, %p129
      %p132 = scmp.ne.s32.totalorder %s117, %s131
      %p133 = scmp.eq.s32.totalorder %s19, 0
      %p134 = por %p132, %p133
      %s135 = ssub.s32 %s20, %s32
      %p136 = scmp.eq.s32.totalorder %s135, 0
      %s138 = sadd.s32 %s137, 1
      %s139 = scalar_select %p136, %s137, %s138
      %p142 = pneg %p136
      %p143 = scmp.eq.s32.totalorder %s13, 3
      %p144 = por %p142, %p143
      %p145 = scmp.ne.s32.totalorder %s137, %s140
      %p146 = scmp.eq.s32.totalorder %s13, 0
      %p147 = por %p145, %p146
      %p148 = scmp.ne.s32.totalorder %s137, %s140
      %p149 = scmp.eq.s32.totalorder %s18, 3
      %p150 = por %p148, %p149
      %p151 = scmp.ne.s32.totalorder %s140, %s141
      %p152 = scmp.eq.s32.totalorder %s18, 0
      %p153 = por %p151, %p152
      %p154 = scmp.ne.s32.totalorder %s140, %s141
      %p155 = scmp.eq.s32.totalorder %s19, 3
      %p156 = por %p154, %p155
      %p158 = scmp.ne.s32.totalorder %s141, %s157
      %p159 = scmp.eq.s32.totalorder %s19, 0
      %p160 = por %p158, %p159
      %p161 = scmp.le.s32.totalorder 1, %s13
      %p162 = scmp.lt.s32.totalorder %s13, 5
      %p163 = pnand %p161, %p162
      %p164 = pneg %p163
      // Predicated region
      $region9: #{tpu_custom_call.1} parent=5 // pred_check
        _
      $region10: #{tpu_custom_call.1} parent=5 // pred_check_branch
        %166 = sbr.rel (%p163) target = $region12
      $region11: #{tpu_custom_call.1} parent=5 // pred_region
        %s167 = ssub.s32 %s13, 1
        // Predicated region
        $region13: #{tpu_custom_call.1} parent=11 // pred_check
          %p168 = pneg %p106
        $region14: #{tpu_custom_call.1} parent=11 // pred_check_branch
          %170 = sbr.rel (%p168) target = $region16
        $region15: #{tpu_custom_call.1} parent=11 // pred_region
          _
        $region16: #{tpu_custom_call.1} parent=11 // pred_fallthru
          _
        // Predicated region
        $region17: #{tpu_custom_call.1} parent=11 // pred_check
          %p171 = pneg %p127
        $region18: #{tpu_custom_call.1} parent=11 // pred_check_branch
          %173 = sbr.rel (%p171) target = $region20
        $region19: #{tpu_custom_call.1} parent=11 // pred_region
          _
        $region20: #{tpu_custom_call.1} parent=11 // pred_fallthru
          _
      $region12: #{tpu_custom_call.1} parent=5 // pred_fallthru
        _
      %p174 = scmp.lt.s32.totalorder %s13, 4
      // Predicated region
      $region21: #{tpu_custom_call.1} parent=5 // pred_check
        %p175 = pneg %p174
      $region22: #{tpu_custom_call.1} parent=5 // pred_check_branch
        %177 = sbr.rel (%p175) target = $region24
      $region23: #{tpu_custom_call.1} parent=5 // pred_region
        // Predicated region
        $region25: #{tpu_custom_call.1} parent=23 // pred_check
          %p178 = pneg %p49
        $region26: #{tpu_custom_call.1} parent=23 // pred_check_branch
          %180 = sbr.rel (%p178) target = $region28
        $region27: #{tpu_custom_call.1} parent=23 // pred_region
          %s181 = smul.u32 %s20, 2
          %s182 = sadd.s32 %s181, %s21
          %s183 = smul.u32 2, %s182
          %p184 = scmp.lt.s32.totalorder %s183, 7
          %s185 = scalar_select %p184, %s183, 7
          %s186 = scalar_lea.vmem %s0, %s185
          %s187 = smul.u32 %s20, 2
          %s188 = sadd.s32 %s187, %s21
          %s189 = smul.u32 2, %s188
        $region28: #{tpu_custom_call.1} parent=23 // pred_fallthru
          _
        // Predicated region
        $region29: #{tpu_custom_call.1} parent=23 // pred_check
          %p190 = pneg %p79
        $region30: #{tpu_custom_call.1} parent=23 // pred_check_branch
          %192 = sbr.rel (%p190) target = $region32
        $region31: #{tpu_custom_call.1} parent=23 // pred_region
          %s193 = sand.u32 %s69, 1
          %s194 = scalar_lea.sflag [#allocation4], %s193
          %s195 = sand.u32 %s69, 1
          %s196 = smul.addr %s195, 16
          %s197 = scalar_lea.vmem [#allocation3], %s196
          %s198 = smul.u32 %s20, 2
          %s199 = sadd.s32 %s198, %s21
          %s200 = smul.u32 2, %s199
          %s202 = ssub.s32 256, 256
          %203 = vsyncadd %s194, %s202
          %s204 = smul.addr %s200, 64
          %s205 = scalar_lea.hbm %s1, %s204
          %s206 = sshll.u32 %s197, 4
          %s207 = int_to_ptr.vmem [resolvable:$true] %s206
          %212 = dma.hbm_to_vmem [thread:$0]  %s205, 256, %s207, %s194, 512, 128, 8
        $region32: #{tpu_custom_call.1} parent=23 // pred_fallthru
          _
      $region24: #{tpu_custom_call.1} parent=5 // pred_fallthru
        _
      %p213 = scmp.le.s32.totalorder 1, %s13
      %p214 = scmp.lt.s32.totalorder %s13, 5
      %p215 = pnand %p213, %p214
      %p216 = pneg %p215
      // Predicated region
      $region33: #{tpu_custom_call.1} parent=5 // pred_check
        _
      $region34: #{tpu_custom_call.1} parent=5 // pred_check_branch
        %218 = sbr.rel (%p215) target = $region36
      $region35: #{tpu_custom_call.1} parent=5 // pred_region
        %s219 = ssub.s32 %s13, 1
        %s220 = sand.u32 %s72, 1
        %s221 = scalar_lea.sflag [#allocation4], %s220
        %s222 = sand.u32 %s72, 1
        %s223 = smul.addr %s222, 16
        %s224 = scalar_lea.vmem [#allocation3], %s223
        // Predicated region
        $region37: #{tpu_custom_call.1} parent=35 // pred_check
          %p225 = pneg %p85
        $region38: #{tpu_custom_call.1} parent=35 // pred_check_branch
          %227 = sbr.rel (%p225) target = $region40
        $region39: #{tpu_custom_call.1} parent=35 // pred_region
          %228 = dma.done %s221, 256
        $region40: #{tpu_custom_call.1} parent=35 // pred_fallthru
          _
        %s229 = smul.u32 %s22, 2
        %s230 = sadd.s32 %s229, %s23
        %s231 = smul.u32 2, %s230
        %p232 = scmp.lt.s32.totalorder %s231, 7
        %s233 = scalar_select %p232, %s231, 7
        %s234 = scalar_lea.vmem %s0, %s233
        %p235 = pneg %p55
        %p236 = pneg %p52
        %s237 = sand.u32 %s72, 1
        %s238 = scalar_lea.sflag [#allocation4], %s237
        %s239 = sand.u32 %s72, 1
        %s240 = smul.addr %s239, 16
        %s241 = scalar_lea.vmem [#allocation3], %s240
        %p242 = pneg %p85
        %p243 = pneg %p82
        %p244 = pneg %p106
        %p245 = pneg %p103
        %p246 = pneg %p127
        %p247 = pneg %p124
        %p248 = pneg %p153
        %p249 = pneg %p150
        %p250 = scmp.lt.s32.totalorder %s22, 1
        %s251 = scalar_select %p250, %s22, 1
        %s252 = smul.addr %s251, 4
        %s253 = smul.addr %s252, 8
        %s254 = scalar_lea.vmem %s4, %s253
        %s255 = smul.u32 %s22, 2
        %s256 = sadd.s32 %s255, %s23
        %s257 = smul.u32 2, %s256
        %p258 = scmp.lt.s32.totalorder %s257, 7
        %s259 = scalar_select %p258, %s257, 7
        %s260 = scalar_lea.vmem %s0, %s259
        %s261 = smul.u32 %s22, 2
        %s262 = sadd.s32 %s261, %s23
        %s263 = smul.u32 2, %s262
        %s264 = smul.u32 %s22, 2
        %s265 = sadd.s32 %s264, %s23
        %s266 = smul.u32 2, %s265
        %p267 = scmp.lt.s32.totalorder %s22, 1
        %s268 = scalar_select %p267, %s22, 1
        %s269 = smul.addr %s268, 4
        %s270 = smul.addr %s269, 8
        %s271 = scalar_lea.vmem %s4, %s270
        %p273 = scmp.eq.s32.totalorder %s23, 0
        // Predicated region
        $region41: #{tpu_custom_call.1} parent=35 // pred_check
          %p274 = pneg %p273
        $region42: #{tpu_custom_call.1} parent=35 // pred_check_branch
          %276 = sbr.rel (%p274) target = $region44
        $region43: #{tpu_custom_call.1} parent=35 // pred_region
          %vm277 = vcmask 64512
          %278 = vst.msk [vmem:[#allocation2] sm:$0xff] %vm277, 0.0
          %279 = vst.msk [vmem:[#allocation2 + $0x8] sm:$0xff] %vm277, 0.0
          %280 = vst.msk [vmem:[#allocation2 + $0x10] sm:$0xff] %vm277, 0.0
          %281 = vst.msk [vmem:[#allocation2 + $0x18] sm:$0xff] %vm277, 0.0
        $region44: #{tpu_custom_call.1} parent=35 // pred_fallthru
          _
        %v282 = vld [vmem:[%s2] sm:$0xf]
        %v283 = vld [vmem:[%s2 + $0x4] sm:$0xf]
        %v284 = vld [vmem:[%s2 + $0x8] sm:$0xf]
        %v285 = vld [vmem:[%s2 + $0xc] sm:$0xf]
        %v286 = vld [vmem:[%s224] sm:$0xff]
        %v287 = vld [vmem:[%s224 + $0x8] sm:$0xff]
        %v288 = vld [vmem:[%s3] sm:$0xff]
        %v289 = vld [vmem:[%s3 + $0x8] sm:$0xff]
        %v290 = vld [vmem:[%s3 + $0x10] sm:$0xff]
        %v291 = vld [vmem:[%s3 + $0x18] sm:$0xff]
        %293 = vset.pattern.permute.xlu0 0
        %294 = vperm.xlu0 %293, %v288
        %v295 = vpop.permute.xlu0 %294
        %298 = vset.pattern.permute.xlu0 0
        %299 = vperm.xlu0 %298, %v289
        %v300 = vpop.permute.xlu0 %299
        %303 = vset.pattern.permute.xlu0 0
        %304 = vperm.xlu0 %303, %v290
        %v305 = vpop.permute.xlu0 %304
        %308 = vset.pattern.permute.xlu0 0
        %309 = vperm.xlu0 %308, %v291
        %v310 = vpop.permute.xlu0 %309
        %v316 = vunpack.c.l.b16 %v282
        %v317 = vunpack.c.l.b16 %v283
        %v318 = vunpack.c.l.b16 %v284
        %v319 = vunpack.c.l.b16 %v285
        %v320 = vpack.c.b16 %v317, %v316
        %v321 = vpack.c.b16 %v319, %v318
        %v324 = vunpack.c.l.b16 %v286
        %v325 = vunpack.c.h.b16 %v286
        %v326 = vunpack.c.l.b16 %v287
        %v327 = vunpack.c.h.b16 %v287
        %v328 = vpack.c.b16 %v326, %v324
        %v329 = vpack.c.b16 %v327, %v325
        %vm332 = vcmask 130048
        %v334 = vsel %vm332, %v320, 0
        %v337 = vsel %vm332, %v321, 0
        %339 = vmatprep.subr.bf16.mxu0 0
        %340 = vmatpush1.bf16.msra.mxu0 0
        %341 = vmatprep.subr.bf16.mxu0 0
        %342 = vmatpush1.bf16.msra.mxu0 0
        %343 = vmatprep.subr.bf16.mxu0 0
        %344 = vmatpush1.bf16.msra.mxu0 0
        %345 = vmatprep.subr.bf16.mxu0 0
        %346 = vmatpush1.bf16.msra.mxu0 0
        %347 = vmatprep.subr.bf16.mxu0 0
        %348 = vmatpush1.bf16.msra.mxu0 0
        %349 = vmatprep.subr.bf16.mxu0 0
        %350 = vmatpush1.bf16.msra.mxu0 0
        %351 = vmatprep.subr.bf16.mxu0 0
        %352 = vmatpush1.bf16.msra.mxu0 0
        %353 = vmatprep.subr.bf16.mxu0 %v329
        %354 = vmatpush1.bf16.msra.mxu0 %v328
        %355 = vmatprep.subr.bf16.mxu0 0
        %356 = vmatpush2.bf16.msra.mxu0 0
        %357 = vmatprep.subr.bf16.mxu0 0
        %358 = vmatpush2.bf16.msra.mxu0 0
        %359 = vmatprep.subr.bf16.mxu0 0
        %360 = vmatpush2.bf16.msra.mxu0 0
        %361 = vmatprep.subr.bf16.mxu0 0
        %362 = vmatpush2.bf16.msra.mxu0 0
        %363 = vmatprep.subr.bf16.mxu0 0
        %364 = vmatpush2.bf16.msra.mxu0 0
        %365 = vmatprep.subr.bf16.mxu0 0
        %366 = vmatpush2.bf16.msra.mxu0 0
        %367 = vmatprep.subr.bf16.mxu0 0
        %368 = vmatpush2.bf16.msra.mxu0 0
        %369 = vmatprep.subr.bf16.mxu0 0
        %370 = vmatpush2.bf16.msra.mxu0 0
        %371 = vmatprep.mubr.bf16.mxu0 0
        %372 = vmatmul.mubr.bf16.gmra.mxu0 %v334
        %v373 = vpop.f32.mrf.mxu0
        %v374 = vadd.f32 %v295, %v373
        %v375 = vpop.f32.mrf.mxu0
        %v376 = vadd.f32 %v295, %v375
        %v377 = vpop.f32.mrf.mxu0
        %v378 = vadd.f32 %v300, %v377
        %v379 = vpop.f32.mrf.mxu0
        %v380 = vadd.f32 %v300, %v379
        %381 = vmatprep.mubr.bf16.mxu0 0
        %382 = vmatmul.mubr.bf16.gmra.mxu0 %v337
        %v383 = vpop.f32.mrf.mxu0
        %v384 = vadd.f32 %v305, %v383
        %v385 = vpop.f32.mrf.mxu0
        %v386 = vadd.f32 %v305, %v385
        %v387 = vpop.f32.mrf.mxu0
        %v388 = vadd.f32 %v310, %v387
        %v389 = vpop.f32.mrf.mxu0
        %v390 = vadd.f32 %v310, %v389
        %391 = vdwg.mxu0
        %v392 = vmax.f32 %v374, 0.0
        %v393 = vmax.f32 %v376, 0.0
        %v394 = vmax.f32 %v378, 0.0
        %v395 = vmax.f32 %v380, 0.0
        %v396 = vmax.f32 %v384, 0.0
        %v397 = vmax.f32 %v386, 0.0
        %v398 = vmax.f32 %v388, 0.0
        %v399 = vmax.f32 %v390, 0.0
        %v400 = vpack.c.bf16 %v394, %v392
        %v401 = vpack.c.bf16 %v395, %v393
        %v402 = vpack.c.bf16 %v398, %v396
        %v403 = vpack.c.bf16 %v399, %v397
        %v404 = vlaneseq
        %v405 = vshrl.u32 %v404, 7
        %v406 = vld [vmem:[%s260] sm:$0x3]
        %v407 = vlaneseq
        %v408 = vshrl.u32 %v407, 7
        %v409 = vsub.s32 0, %v408
        %v410 = vrot.slane %v406, %v409
        %v411 = vlaneseq
        %v412 = vshrl.u32 %v411, 7
        %v413 = vsub.s32 1, %v412
        %v414 = vrot.slane %v406, %v413
        %vm415 = vcmp.eq.s32.totalorder %v405, %v410
        %vm416 = vcmp.eq.s32.totalorder %v405, %v414
        %v417 = vsel %vm415, 1, 0
        %v418 = vsel %vm416, 1, 0
        %v419 = vcvt.s32.f32 %v417
        %v420 = vcvt.s32.f32 %v418
        %v421 = vpack.c.bf16 %v419, %v419
        %v422 = vpack.c.bf16 %v420, %v420
        %v423 = vld [vmem:[#allocation2] sm:$0xff]
        %v424 = vld [vmem:[#allocation2 + $0x8] sm:$0xff]
        %v425 = vld [vmem:[#allocation2 + $0x10] sm:$0xff]
        %v426 = vld [vmem:[#allocation2 + $0x18] sm:$0xff]
        %427 = vmatprep.subr.bf16.mxu0 0
        %428 = vmatpush1.bf16.xpose.msra.mxu0 0
        %429 = vmatprep.subr.bf16.mxu0 0
        %430 = vmatpush1.bf16.xpose.msra.mxu0 0
        %431 = vmatprep.subr.bf16.mxu0 0
        %432 = vmatpush1.bf16.xpose.msra.mxu0 0
        %433 = vmatprep.subr.bf16.mxu0 0
        %434 = vmatpush1.bf16.xpose.msra.mxu0 0
        %435 = vmatprep.subr.bf16.mxu0 0
        %436 = vmatpush1.bf16.xpose.msra.mxu0 0
        %437 = vmatprep.subr.bf16.mxu0 0
        %438 = vmatpush1.bf16.xpose.msra.mxu0 0
        %439 = vmatprep.subr.bf16.mxu0 0
        %440 = vmatpush1.bf16.xpose.msra.mxu0 0
        %441 = vmatprep.subr.bf16.mxu0 %v422
        %442 = vmatpush1.bf16.xpose.msra.mxu0 %v421
        %443 = vmatprep.subr.bf16.mxu0 0
        %444 = vmatpush2.bf16.xpose.msra.mxu0 0
        %445 = vmatprep.subr.bf16.mxu0 0
        %446 = vmatpush2.bf16.xpose.msra.mxu0 0
        %447 = vmatprep.subr.bf16.mxu0 0
        %448 = vmatpush2.bf16.xpose.msra.mxu0 0
        %449 = vmatprep.subr.bf16.mxu0 0
        %450 = vmatpush2.bf16.xpose.msra.mxu0 0
        %451 = vmatprep.subr.bf16.mxu0 0
        %452 = vmatpush2.bf16.xpose.msra.mxu0 0
        %453 = vmatprep.subr.bf16.mxu0 0
        %454 = vmatpush2.bf16.xpose.msra.mxu0 0
        %455 = vmatprep.subr.bf16.mxu0 0
        %456 = vmatpush2.bf16.xpose.msra.mxu0 0
        %457 = vmatprep.subr.bf16.mxu0 0
        %458 = vmatpush2.bf16.xpose.msra.mxu0 0
        %459 = vmatprep.mubr.bf16.mxu0 %v401
        %460 = vmatmul.mubr.bf16.gmra.mxu0 %v400
        %v461 = vpop.f32.mrf.mxu0
        %v462 = vadd.f32 0.0, %v461
        %v463 = vpop.f32.mrf.mxu0
        %v464 = vpop.f32.mrf.mxu0
        %v465 = vadd.f32 0.0, %v464
        %v466 = vpop.f32.mrf.mxu0
        %467 = vmatprep.mubr.bf16.mxu0 %v403
        %468 = vmatmul.mubr.bf16.gmra.mxu0 %v402
        %v469 = vpop.f32.mrf.mxu0
        %v470 = vadd.f32 0.0, %v469
        %v471 = vpop.f32.mrf.mxu0
        %v472 = vpop.f32.mrf.mxu0
        %v473 = vadd.f32 0.0, %v472
        %v474 = vpop.f32.mrf.mxu0
        %475 = vdwg.mxu0
        %v476 = vadd.f32 %v423, %v462
        %v477 = vadd.f32 %v424, %v465
        %v478 = vadd.f32 %v425, %v470
        %v479 = vadd.f32 %v426, %v473
        %vm480 = vcmask 64512
        %481 = vst.msk [vmem:[#allocation2] sm:$0xff] %vm480, %v476
        %482 = vst.msk [vmem:[#allocation2 + $0x8] sm:$0xff] %vm480, %v477
        %483 = vst.msk [vmem:[#allocation2 + $0x10] sm:$0xff] %vm480, %v478
        %484 = vst.msk [vmem:[#allocation2 + $0x18] sm:$0xff] %vm480, %v479
        %p485 = scmp.eq.s32.totalorder %s23, 1
        // Predicated region
        $region45: #{tpu_custom_call.1} parent=35 // pred_check
          %p486 = pneg %p485
        $region46: #{tpu_custom_call.1} parent=35 // pred_check_branch
          %488 = sbr.rel (%p486) target = $region48
        $region47: #{tpu_custom_call.1} parent=35 // pred_region
          %v489 = vld [vmem:[#allocation2] sm:$0xff]
          %v490 = vld [vmem:[#allocation2 + $0x8] sm:$0xff]
          %v491 = vld [vmem:[#allocation2 + $0x10] sm:$0xff]
          %v492 = vld [vmem:[#allocation2 + $0x18] sm:$0xff]
          %493 = vst.msk [vmem:[%s271] sm:$0xff] %vm480, %v489
          %494 = vst.msk [vmem:[%s271 + $0x8] sm:$0xff] %vm480, %v490
          %495 = vst.msk [vmem:[%s271 + $0x10] sm:$0xff] %vm480, %v491
          %496 = vst.msk [vmem:[%s271 + $0x18] sm:$0xff] %vm480, %v492
        $region48: #{tpu_custom_call.1} parent=35 // pred_fallthru
          _
        %p497 = scmp.lt.s32.totalorder %s22, 1
        %s498 = scalar_select %p497, %s22, 1
        %s499 = smul.addr %s498, 4
        %s500 = smul.addr %s499, 8
        %s501 = scalar_lea.vmem %s4, %s500
        // Predicated region
        $region49: #{tpu_custom_call.1} parent=35 // pred_check
          %p502 = pneg %p150
        $region50: #{tpu_custom_call.1} parent=35 // pred_check_branch
          %504 = sbr.rel (%p502) target = $region52
        $region51: #{tpu_custom_call.1} parent=35 // pred_region
          _
        $region52: #{tpu_custom_call.1} parent=35 // pred_fallthru
          _
      $region36: #{tpu_custom_call.1} parent=5 // pred_fallthru
        _
      %p505 = scmp.le.s32.totalorder 2, %s13
      // Predicated region
      $region53: #{tpu_custom_call.1} parent=5 // pred_check
        %p506 = pneg %p505
      $region54: #{tpu_custom_call.1} parent=5 // pred_check_branch
        %508 = sbr.rel (%p506) target = $region56
      $region55: #{tpu_custom_call.1} parent=5 // pred_region
        %s509 = ssub.s32 %s13, 2
        // Predicated region
        $region57: #{tpu_custom_call.1} parent=55 // pred_check
          %p510 = pneg %p156
        $region58: #{tpu_custom_call.1} parent=55 // pred_check_branch
          %512 = sbr.rel (%p510) target = $region60
        $region59: #{tpu_custom_call.1} parent=55 // pred_region
          %p513 = scmp.lt.s32.totalorder %s24, 1
          %s514 = scalar_select %p513, %s24, 1
          %s515 = smul.addr %s514, 4
          %s516 = smul.addr %s515, 8
          %s517 = scalar_lea.vmem %s4, %s516
        $region60: #{tpu_custom_call.1} parent=55 // pred_fallthru
          _
      $region56: #{tpu_custom_call.1} parent=5 // pred_fallthru
        _
    $region6: #{tpu_custom_call.1} parent=1 // loop_footer
      %s17 = sadd.s32 1, %s13
    $region7: #{tpu_custom_call.1} parent=1 // loop_footer_branch
      %12 = sbr.rel target = $region3
    $region8: #{tpu_custom_call.1} parent=1 // loop_exit
      _
    %518 = vsyncpa [#allocation4], 1
    %s519 = scalar_lea.sflag [#allocation4], 1
    %520 = vsyncpa %s519, 1

</llo_original>
